<compile_context>
chip_gen: v7x
topology: tpu7x:2x2x1
jax: 0.10.0
libtpu: 0.0.40
codegen_flags: <defaults>
</compile_context>

<pallas_src>
import functools

import jax
import jax.numpy as jnp
from jax.experimental import pallas as pl
from jax.experimental.pallas import tpu as pltpu

EPS = 1e-5  # nn.BatchNorm1d default


def resblock_kernel(x_ref, sc1_ref, sh1_ref, w1_ref, b1_ref,
                    g2_ref, be2_ref, w2_ref, b2_ref,
                    o_ref,
                    sum_ref, sq_ref, sc2_ref, sh2_ref,
                    *, K, L, M):
  """Two-phase grid over (phase, tile).

  Phase 0: per tile, compute h1 = conv1(relu(bn1(x))) and accumulate BN2 batch
           statistics (sum, sum^2) into persistent VMEM scratch; finalize the
           folded BN2 scale/shift on the last tile.
  Phase 1: recompute h1 per tile (cheaper than an HBM store+reload round trip),
           then bn2 -> relu -> conv2 -> + residual and write the output tile.

  Per-tile shapes:
    x_ref, o_ref              : (C, T)     T = lanes per tile, T % L == 0
    sc1/sh1/b1/g2/be2/b2      : (C, 1)
    w1_ref, w2_ref            : (C, K*C)   fused-tap weights (tap-major cols)
    sum/sq/sc2/sh2 (scratch)  : (C, 1)
  """
  phase = pl.program_id(0)
  i = pl.program_id(1)
  n_tiles = pl.num_programs(1)
  C, T = x_ref.shape

  x = x_ref[...]

  # Position of every lane inside its length-L sequence.  Tiles always start on
  # a sequence boundary (T % L == 0), so no cross-tile halo is required.
  pos = jax.lax.broadcasted_iota(jnp.int32, (C, T), 1) % L
  seg_mask = [None] + [pos >= s for s in range(1, K)]

  def shift_right(a, s):
    # a[c, m] -> a[c, m - s] within each length-L sequence, zero-filled.
    # Cheap lane slice + concat + mask (replaces the old dense (M, M)
    # shift-matrix matmuls).
    if s == 0:
      return a
    z = jnp.zeros((C, s), dtype=a.dtype)
    shifted = jnp.concatenate([z, a[:, :T - s]], axis=1)
    return jnp.where(seg_mask[s], shifted, 0.0)

  def causal_conv(a, w_ref, b_ref):
    # All K taps fused into a single (C, K*C) x (K*C, T) MXU matmul at default
    # precision with f32 accumulation; bias added once at the end.
    stack = jnp.concatenate([shift_right(a, K - 1 - k) for k in range(K)],
                            axis=0)
    return jnp.dot(w_ref[...], stack,
                   preferred_element_type=jnp.float32) + b_ref[...]

  # ---- shared by both phases: h1 = conv1(relu(bn1(x))) ---------------------
  # BN1 batch stats are precomputed in the wrapper and folded into scale/shift.
  a1 = jnp.maximum(x * sc1_ref[...] + sh1_ref[...], 0.0)
  h1 = causal_conv(a1, w1_ref, b1_ref)

  # ---- phase 0: accumulate BN2 batch statistics (single pass) --------------
  @pl.when(phase == 0)
  def _():
    @pl.when(i == 0)
    def _():
      sum_ref[...] = jnp.zeros_like(sum_ref)
      sq_ref[...] = jnp.zeros_like(sq_ref)

    sum_ref[...] += jnp.sum(h1, axis=1, keepdims=True)
    sq_ref[...] += jnp.sum(h1 * h1, axis=1, keepdims=True)

    @pl.when(i == n_tiles - 1)
    def _():
      mean2 = sum_ref[...] * (1.0 / M)
      # One-pass biased (training-mode) variance; clamp guards small negative
      # values that E[x^2] - E[x]^2 can produce from cancellation.
      var2 = jnp.maximum(sq_ref[...] * (1.0 / M) - mean2 * mean2, 0.0)
      rstd2 = jax.lax.rsqrt(var2 + EPS)
      sc2_ref[...] = g2_ref[...] * rstd2
      sh2_ref[...] = be2_ref[...] - mean2 * g2_ref[...] * rstd2

  # ---- phase 1: bn2 -> relu -> conv2 -> residual ---------------------------
  @pl.when(phase == 1)
  def _():
    a2 = jnp.maximum(h1 * sc2_ref[...] + sh2_ref[...], 0.0)
    h2 = causal_conv(a2, w2_ref, b2_ref)
    o_ref[...] = (h2 + x).astype(o_ref.dtype)


def _choose_tiling(N, L, target_lanes=4096):
  """Tiles cover whole sequences (no conv halo).  Pick nb sequences per tile so
  nb divides N and nb*L is a multiple of 128 (lane-dense blocks); otherwise
  fall back to a single full-array block (always legal for a BlockSpec)."""
  best = None
  for nb in range(1, N + 1):
    if N % nb or (nb * L) % 128:
      continue
    if best is None or abs(nb * L - target_lanes) < abs(best * L - target_lanes):
      best = nb
  if best is None or best == N:
    return N * L, 1
  return best * L, N // best


def resblock_pallas(x, params, K):
  """x: (N, C, L) float32 (NCL, as in PyTorch).  params: (g1, be1, w1, b1, g2,
  be2, w2, b2) with PyTorch shapes.  Training-mode BatchNorm semantics."""
  N, C, L = x.shape
  M = N * L
  g1, be1, w1, b1, g2, be2, w2, b2 = params

  # BN1 batch statistics: a tiny (C,)-sized reduction done in plain JAX and
  # folded into a single per-channel scale/shift for the kernel.
  mean1 = jnp.mean(x, axis=(0, 2))
  var1 = jnp.maximum(jnp.mean(jnp.square(x), axis=(0, 2)) - mean1 * mean1, 0.0)
  rstd1 = jax.lax.rsqrt(var1 + EPS)
  scale1 = g1 * rstd1
  shift1 = be1 - mean1 * scale1

  # Layout: (C, N*L) — channels on sublanes, flattened batch*length on lanes.
  # TODO(synk): this transpose is an extra HBM round trip on both sides of the
  # kernel; fold it into the producer/consumer when fusing further.
  x2 = jnp.transpose(x, (1, 0, 2)).reshape(C, M)

  # Fused-tap conv weights: column block k holds PyTorch w[:, :, k].
  wf1 = jnp.transpose(w1, (0, 2, 1)).reshape(C, K * C)
  wf2 = jnp.transpose(w2, (0, 2, 1)).reshape(C, K * C)
  col = lambda v: v.reshape(C, 1).astype(jnp.float32)

  tile_m, n_tiles = _choose_tiling(N, L)

  x_spec = pl.BlockSpec((C, tile_m), lambda p, i: (0, i))
  par = lambda cols: pl.BlockSpec((C, cols), lambda p, i: (0, 0))
  # Phase 0 never writes the output; parking its block index at 0 (p * i)
  # keeps the output block resident so no garbage is ever written back.
  out_spec = pl.BlockSpec((C, tile_m), lambda p, i: (0, p * i))

  # VMEM budget: double-buffered x/out tiles + the K-wide shifted stack and a
  # few (C, tile_m) temporaries, with headroom (capped below v7x's 64 MiB).
  tile_bytes = 4 * C * tile_m
  vmem_limit = int(min(48 * 1024 * 1024,
                       max(16 * 1024 * 1024, (10 + 2 * K) * tile_bytes)))

  out2 = pl.pallas_call(
      functools.partial(resblock_kernel, K=K, L=L, M=M),
      grid=(2, n_tiles),  # (phase, tile); tiles iterate fastest
      out_shape=jax.ShapeDtypeStruct((C, M), jnp.float32),
      in_specs=[x_spec,
                par(1), par(1),        # BN1 folded scale / shift
                par(K * C), par(1),    # conv1 fused weights / bias
                par(1), par(1),        # BN2 gamma / beta
                par(K * C), par(1)],   # conv2 fused weights / bias
      out_specs=out_spec,
      scratch_shapes=[pltpu.VMEM((C, 1), jnp.float32)] * 4,
      compiler_params=pltpu.CompilerParams(
          # Both grid axes carry the phase ordering / cross-tile BN2 reduction,
          # so they stay "arbitrary".
          # TODO(synk): a v7x 2-TC split would need per-core partial BN2 sums.
          dimension_semantics=("arbitrary", "arbitrary"),
          vmem_limit_bytes=vmem_limit),
  )(x2, col(scale1), col(shift1), wf1, col(b1), col(g2), col(be2), wf2, col(b2))

  return jnp.transpose(out2.reshape(C, N, L), (1, 0, 2))   # back to NCL


# ---------------- pure-JAX reference (for validation) ----------------
def resblock_ref(x, params, K):
  g1, be1, w1, b1, g2, be2, w2, b2 = params

  def bn_relu(h, g, b):
    mean = jnp.mean(h, axis=(0, 2), keepdims=True)
    var = jnp.mean((h - mean) ** 2, axis=(0, 2), keepdims=True)
    hn = (h - mean) / jnp.sqrt(var + EPS)
    return jax.nn.relu(hn * g[None, :, None] + b[None, :, None])

  def causal_conv(h, w, b):
    hp = jnp.pad(h, ((0, 0), (0, 0), (K - 1, 0)))
    out = jax.lax.conv_general_dilated(
        hp, w, window_strides=(1,), padding="VALID",
        dimension_numbers=("NCH", "OIH", "NCH"),
        precision=jax.lax.Precision.HIGHEST)
    return out + b[None, :, None]

  h = causal_conv(bn_relu(x, g1, be1), w1, b1)
  h = causal_conv(bn_relu(h, g2, be2), w2, b2)
  return h + x


if __name__ == "__main__":
  N, C, L, K = 2, 8, 16, 3

  key = jax.random.PRNGKey(0)
  ks = jax.random.split(key, 9)
  x = jax.random.normal(ks[0], (N, C, L), jnp.float32)
  g1 = 1.0 + 0.1 * jax.random.normal(ks[1], (C,), jnp.float32)
  be1 = 0.1 * jax.random.normal(ks[2], (C,), jnp.float32)
  w1 = 0.2 * jax.random.normal(ks[3], (C, C, K), jnp.float32)
  b1 = 0.1 * jax.random.normal(ks[4], (C,), jnp.float32)
  g2 = 1.0 + 0.1 * jax.random.normal(ks[5], (C,), jnp.float32)
  be2 = 0.1 * jax.random.normal(ks[6], (C,), jnp.float32)
  w2 = 0.2 * jax.random.normal(ks[7], (C, C, K), jnp.float32)
  b2 = 0.1 * jax.random.normal(ks[8], (C,), jnp.float32)
  params = (g1, be1, w1, b1, g2, be2, w2, b2)

  out = resblock_pallas(x, params, K)
  out = jax.block_until_ready(out)

  ref = resblock_ref(x, params, K)
  assert out.shape == (N, C, L) and out.dtype == jnp.float32
  # Tolerance reflects default-precision MXU matmuls (bf16 multiply passes, f32
  # accumulate) vs. the HIGHEST-precision reference, per the perf guidance.
  err = float(jnp.max(jnp.abs(out - ref)))
  assert jnp.allclose(out, ref, atol=2e-2, rtol=2e-2), err
  print("KERNEL_OK")
</pallas_src>

<mosaic_0001>
module attributes {stable_mosaic.version = 11 : i64} {
  func.func @resblock_kernel(%arg0: i32, %arg1: i32, %arg2: memref<8x32xf32, #tpu.memory_space<vmem>>, %arg3: memref<8x1xf32, #tpu.memory_space<vmem>>, %arg4: memref<8x1xf32, #tpu.memory_space<vmem>>, %arg5: memref<8x24xf32, #tpu.memory_space<vmem>>, %arg6: memref<8x1xf32, #tpu.memory_space<vmem>>, %arg7: memref<8x1xf32, #tpu.memory_space<vmem>>, %arg8: memref<8x1xf32, #tpu.memory_space<vmem>>, %arg9: memref<8x24xf32, #tpu.memory_space<vmem>>, %arg10: memref<8x1xf32, #tpu.memory_space<vmem>>, %arg11: memref<8x32xf32, #tpu.memory_space<vmem>>, %arg12: memref<8x1xf32, #tpu.memory_space<vmem>>, %arg13: memref<8x1xf32, #tpu.memory_space<vmem>>, %arg14: memref<8x1xf32, #tpu.memory_space<vmem>>, %arg15: memref<8x1xf32, #tpu.memory_space<vmem>>) attributes {dimension_semantics = [#tpu.dimension_semantics<arbitrary>, #tpu.dimension_semantics<arbitrary>], iteration_bounds = array<i64: 2, 1>, scalar_prefetch = 0 : i64, scratch_operands = 4 : i64, tpu.core_type = #tpu.core_type<tc>, window_params = [{transform_indices = @transform_0, window_bounds = array<i64: 8, 32>}, {pipeline_mode = #tpu.pipeline_mode<synchronous>, transform_indices = @transform_1, window_bounds = array<i64: 8, 1>}, {pipeline_mode = #tpu.pipeline_mode<synchronous>, transform_indices = @transform_2, window_bounds = array<i64: 8, 1>}, {pipeline_mode = #tpu.pipeline_mode<synchronous>, transform_indices = @transform_3, window_bounds = array<i64: 8, 24>}, {pipeline_mode = #tpu.pipeline_mode<synchronous>, transform_indices = @transform_4, window_bounds = array<i64: 8, 1>}, {pipeline_mode = #tpu.pipeline_mode<synchronous>, transform_indices = @transform_5, window_bounds = array<i64: 8, 1>}, {pipeline_mode = #tpu.pipeline_mode<synchronous>, transform_indices = @transform_6, window_bounds = array<i64: 8, 1>}, {pipeline_mode = #tpu.pipeline_mode<synchronous>, transform_indices = @transform_7, window_bounds = array<i64: 8, 24>}, {pipeline_mode = #tpu.pipeline_mode<synchronous>, transform_indices = @transform_8, window_bounds = array<i64: 8, 1>}, {transform_indices = @transform_9, window_bounds = array<i64: 8, 32>}]} {
    %c0 = arith.constant 0 : index
    %c0_0 = arith.constant 0 : index
    %0 = vector.load %arg2[%c0, %c0_0] : memref<8x32xf32, #tpu.memory_space<vmem>>, vector<8x32xf32>
    %1 = tpu.iota {dimensions = array<i32: 1>} : vector<8x32xi32>
    %c16_i32 = arith.constant 16 : i32
    %c0_i32 = arith.constant 0 : i32
    %2 = arith.cmpi eq, %c16_i32, %c0_i32 : i32
    %c1_i32 = arith.constant 1 : i32
    %3 = arith.select %2, %c1_i32, %c16_i32 : i32
    %4 = vector.broadcast %3 : i32 to vector<8x32xi32>
    %5 = arith.remsi %1, %4 : vector<8x32xi32>
    %c0_i32_1 = arith.constant 0 : i32
    %6 = vector.broadcast %c0_i32_1 : i32 to vector<8x32xi32>
    %7 = arith.cmpi ne, %5, %6 : vector<8x32xi32>
    %c0_i32_2 = arith.constant 0 : i32
    %8 = vector.broadcast %c0_i32_2 : i32 to vector<8x32xi32>
    %9 = arith.cmpi slt, %5, %8 : vector<8x32xi32>
    %c0_i32_3 = arith.constant 0 : i32
    %10 = arith.cmpi slt, %3, %c0_i32_3 : i32
    %11 = vector.broadcast %10 : i1 to vector<8x32xi1>
    %12 = vector.broadcast %11 : vector<8x32xi1> to vector<8x32xi1>
    %13 = arith.xori %9, %12 : vector<8x32xi1>
    %14 = arith.andi %13, %7 : vector<8x32xi1>
    %15 = vector.broadcast %3 : i32 to vector<8x32xi32>
    %16 = arith.addi %5, %15 : vector<8x32xi32>
    %17 = arith.select %14, %16, %5 : vector<8x32xi1>, vector<8x32xi32>
    %c1_i32_4 = arith.constant 1 : i32
    %18 = vector.broadcast %c1_i32_4 : i32 to vector<8x32xi32>
    %19 = arith.cmpi sge, %17, %18 : vector<8x32xi32>
    %c2_i32 = arith.constant 2 : i32
    %20 = vector.broadcast %c2_i32 : i32 to vector<8x32xi32>
    %21 = arith.cmpi sge, %17, %20 : vector<8x32xi32>
    %c0_5 = arith.constant 0 : index
    %c0_6 = arith.constant 0 : index
    %22 = vector.load %arg3[%c0_5, %c0_6] : memref<8x1xf32, #tpu.memory_space<vmem>>, vector<8x1xf32>
    %23 = vector.broadcast %22 : vector<8x1xf32> to vector<8x32xf32>
    %24 = arith.mulf %0, %23 : vector<8x32xf32>
    %c0_7 = arith.constant 0 : index
    %c0_8 = arith.constant 0 : index
    %25 = vector.load %arg4[%c0_7, %c0_8] : memref<8x1xf32, #tpu.memory_space<vmem>>, vector<8x1xf32>
    %26 = vector.broadcast %25 : vector<8x1xf32> to vector<8x32xf32>
    %27 = arith.addf %24, %26 : vector<8x32xf32>
    %cst = arith.constant 0.000000e+00 : f32
    %28 = vector.broadcast %cst : f32 to vector<8x32xf32>
    %29 = arith.maximumf %27, %28 : vector<8x32xf32>
    %cst_9 = arith.constant 0.000000e+00 : f32
    %30 = vector.broadcast %cst_9 : f32 to vector<8x2xf32>
    %31 = vector.extract_strided_slice %29 {offsets = [0, 0], sizes = [8, 30], strides = [1, 1]} : vector<8x32xf32> to vector<8x30xf32>
    %32 = tpu.concatenate %30, %31 in 1 : vector<8x2xf32>, vector<8x30xf32> -> vector<8x32xf32>
    %cst_10 = arith.constant 0.000000e+00 : f32
    %33 = vector.broadcast %cst_10 : f32 to vector<8x32xf32>
    %34 = arith.select %21, %32, %33 : vector<8x32xi1>, vector<8x32xf32>
    %cst_11 = arith.constant 0.000000e+00 : f32
    %35 = vector.broadcast %cst_11 : f32 to vector<8x1xf32>
    %36 = vector.extract_strided_slice %29 {offsets = [0, 0], sizes = [8, 31], strides = [1, 1]} : vector<8x32xf32> to vector<8x31xf32>
    %37 = tpu.concatenate %35, %36 in 1 : vector<8x1xf32>, vector<8x31xf32> -> vector<8x32xf32>
    %cst_12 = arith.constant 0.000000e+00 : f32
    %38 = vector.broadcast %cst_12 : f32 to vector<8x32xf32>
    %39 = arith.select %19, %37, %38 : vector<8x32xi1>, vector<8x32xf32>
    %40 = tpu.concatenate %34, %39, %29 in 0 : vector<8x32xf32>, vector<8x32xf32>, vector<8x32xf32> -> vector<24x32xf32>
    %c0_13 = arith.constant 0 : index
    %c0_14 = arith.constant 0 : index
    %41 = vector.load %arg5[%c0_13, %c0_14] : memref<8x24xf32, #tpu.memory_space<vmem>>, vector<8x24xf32>
    %cst_15 = arith.constant dense<0.000000e+00> : vector<8x32xf32>
    %42 = tpu.matmul %41, %40, %cst_15 {dimension_numbers = #tpu.dot_dimension_numbers<[1], [0], [0], [1], [0, 0, 1, 1], [], []>} : vector<8x24xf32>, vector<24x32xf32>, vector<8x32xf32> -> vector<8x32xf32>
    %c0_16 = arith.constant 0 : index
    %c0_17 = arith.constant 0 : index
    %43 = vector.load %arg6[%c0_16, %c0_17] : memref<8x1xf32, #tpu.memory_space<vmem>>, vector<8x1xf32>
    %44 = vector.broadcast %43 : vector<8x1xf32> to vector<8x32xf32>
    %45 = arith.addf %42, %44 : vector<8x32xf32>
    %c0_i32_18 = arith.constant 0 : i32
    %46 = arith.cmpi eq, %arg0, %c0_i32_18 : i32
    %47 = arith.extui %46 : i1 to i32
    %c0_i32_19 = arith.constant 0 : i32
    %48 = arith.cmpi ne, %47, %c0_i32_19 : i32
    scf.if %48 {
      %c0_i32_22 = arith.constant 0 : i32
      %52 = arith.cmpi eq, %arg1, %c0_i32_22 : i32
      %53 = arith.extui %52 : i1 to i32
      %c0_i32_23 = arith.constant 0 : i32
      %54 = arith.cmpi ne, %53, %c0_i32_23 : i32
      scf.if %54 {
        %cst_36 = arith.constant 0.000000e+00 : f32
        %69 = vector.broadcast %cst_36 : f32 to vector<8x1xf32>
        %c0_37 = arith.constant 0 : index
        %c0_38 = arith.constant 0 : index
        %70 = vector.load %arg12[%c0_37, %c0_38] : memref<8x1xf32, #tpu.memory_space<vmem>>, vector<8x1xf32>
        tpu.vector_store %arg12[%c0_37, %c0_38], %69 {strides = array<i32>} : memref<8x1xf32, #tpu.memory_space<vmem>>, vector<8x1xf32>,
        %cst_39 = arith.constant 0.000000e+00 : f32
        %71 = vector.broadcast %cst_39 : f32 to vector<8x1xf32>
        %c0_40 = arith.constant 0 : index
        %c0_41 = arith.constant 0 : index
        %72 = vector.load %arg13[%c0_40, %c0_41] : memref<8x1xf32, #tpu.memory_space<vmem>>, vector<8x1xf32>
        tpu.vector_store %arg13[%c0_40, %c0_41], %71 {strides = array<i32>} : memref<8x1xf32, #tpu.memory_space<vmem>>, vector<8x1xf32>,
      } else {
      }
      %c0_24 = arith.constant 0 : index
      %c0_25 = arith.constant 0 : index
      %55 = vector.load %arg12[%c0_24, %c0_25] : memref<8x1xf32, #tpu.memory_space<vmem>>, vector<8x1xf32>
      %cst_26 = arith.constant dense<0.000000e+00> : vector<8xf32>
      %56 = vector.multi_reduction <add>, %45, %cst_26 [1] : vector<8x32xf32> to vector<8xf32>
      %57 = vector.shape_cast %56 : vector<8xf32> to vector<8x1xf32>
      %58 = arith.addf %55, %57 : vector<8x1xf32>
      %c0_27 = arith.constant 0 : index
      %c0_28 = arith.constant 0 : index
      %59 = vector.load %arg12[%c0_27, %c0_28] : memref<8x1xf32, #tpu.memory_space<vmem>>, vector<8x1xf32>
      tpu.vector_store %arg12[%c0_27, %c0_28], %58 {strides = array<i32>} : memref<8x1xf32, #tpu.memory_space<vmem>>, vector<8x1xf32>,
      %c0_29 = arith.constant 0 : index
      %c0_30 = arith.constant 0 : index
      %60 = vector.load %arg13[%c0_29, %c0_30] : memref<8x1xf32, #tpu.memory_space<vmem>>, vector<8x1xf32>
      %61 = arith.mulf %45, %45 : vector<8x32xf32>
      %cst_31 = arith.constant dense<0.000000e+00> : vector<8xf32>
      %62 = vector.multi_reduction <add>, %61, %cst_31 [1] : vector<8x32xf32> to vector<8xf32>
      %63 = vector.shape_cast %62 : vector<8xf32> to vector<8x1xf32>
      %64 = arith.addf %60, %63 : vector<8x1xf32>
      %c0_32 = arith.constant 0 : index
      %c0_33 = arith.constant 0 : index
      %65 = vector.load %arg13[%c0_32, %c0_33] : memref<8x1xf32, #tpu.memory_space<vmem>>, vector<8x1xf32>
      tpu.vector_store %arg13[%c0_32, %c0_33], %64 {strides = array<i32>} : memref<8x1xf32, #tpu.memory_space<vmem>>, vector<8x1xf32>,
      %c0_i32_34 = arith.constant 0 : i32
      %66 = arith.cmpi eq, %arg1, %c0_i32_34 : i32
      %67 = arith.extui %66 : i1 to i32
      %c0_i32_35 = arith.constant 0 : i32
      %68 = arith.cmpi ne, %67, %c0_i32_35 : i32
      scf.if %68 {
        %c0_36 = arith.constant 0 : index
        %c0_37 = arith.constant 0 : index
        %69 = vector.load %arg12[%c0_36, %c0_37] : memref<8x1xf32, #tpu.memory_space<vmem>>, vector<8x1xf32>
        %cst_38 = arith.constant 3.125000e-02 : f32
        %70 = vector.broadcast %cst_38 : f32 to vector<8x1xf32>
        %71 = arith.mulf %69, %70 : vector<8x1xf32>
        %c0_39 = arith.constant 0 : index
        %c0_40 = arith.constant 0 : index
        %72 = vector.load %arg13[%c0_39, %c0_40] : memref<8x1xf32, #tpu.memory_space<vmem>>, vector<8x1xf32>
        %cst_41 = arith.constant 3.125000e-02 : f32
        %73 = vector.broadcast %cst_41 : f32 to vector<8x1xf32>
        %74 = arith.mulf %72, %73 : vector<8x1xf32>
        %75 = arith.mulf %71, %71 : vector<8x1xf32>
        %76 = arith.subf %74, %75 : vector<8x1xf32>
        %cst_42 = arith.constant 0.000000e+00 : f32
        %77 = vector.broadcast %cst_42 : f32 to vector<8x1xf32>
        %78 = arith.maximumf %76, %77 : vector<8x1xf32>
        %cst_43 = arith.constant 9.99999974E-6 : f32
        %79 = vector.broadcast %cst_43 : f32 to vector<8x1xf32>
        %80 = arith.addf %78, %79 : vector<8x1xf32>
        %81 = math.rsqrt %80 : vector<8x1xf32>
        %c0_44 = arith.constant 0 : index
        %c0_45 = arith.constant 0 : index
        %82 = vector.load %arg7[%c0_44, %c0_45] : memref<8x1xf32, #tpu.memory_space<vmem>>, vector<8x1xf32>
        %83 = arith.mulf %82, %81 : vector<8x1xf32>
        %c0_46 = arith.constant 0 : index
        %c0_47 = arith.constant 0 : index
        %84 = vector.load %arg14[%c0_46, %c0_47] : memref<8x1xf32, #tpu.memory_space<vmem>>, vector<8x1xf32>
        tpu.vector_store %arg14[%c0_46, %c0_47], %83 {strides = array<i32>} : memref<8x1xf32, #tpu.memory_space<vmem>>, vector<8x1xf32>,
        %c0_48 = arith.constant 0 : index
        %c0_49 = arith.constant 0 : index
        %85 = vector.load %arg8[%c0_48, %c0_49] : memref<8x1xf32, #tpu.memory_space<vmem>>, vector<8x1xf32>
        %c0_50 = arith.constant 0 : index
        %c0_51 = arith.constant 0 : index
        %86 = vector.load %arg7[%c0_50, %c0_51] : memref<8x1xf32, #tpu.memory_space<vmem>>, vector<8x1xf32>
        %87 = arith.mulf %71, %86 : vector<8x1xf32>
        %88 = arith.mulf %87, %81 : vector<8x1xf32>
        %89 = arith.subf %85, %88 : vector<8x1xf32>
        %c0_52 = arith.constant 0 : index
        %c0_53 = arith.constant 0 : index
        %90 = vector.load %arg15[%c0_52, %c0_53] : memref<8x1xf32, #tpu.memory_space<vmem>>, vector<8x1xf32>
        tpu.vector_store %arg15[%c0_52, %c0_53], %89 {strides = array<i32>} : memref<8x1xf32, #tpu.memory_space<vmem>>, vector<8x1xf32>,
      } else {
      }
    } else {
    }
    %c1_i32_20 = arith.constant 1 : i32
    %49 = arith.cmpi eq, %arg0, %c1_i32_20 : i32
    %50 = arith.extui %49 : i1 to i32
    %c0_i32_21 = arith.constant 0 : i32
    %51 = arith.cmpi ne, %50, %c0_i32_21 : i32
    scf.if %51 {
      %c0_22 = arith.constant 0 : index
      %c0_23 = arith.constant 0 : index
      %52 = vector.load %arg14[%c0_22, %c0_23] : memref<8x1xf32, #tpu.memory_space<vmem>>, vector<8x1xf32>
      %53 = vector.broadcast %52 : vector<8x1xf32> to vector<8x32xf32>
      %54 = arith.mulf %45, %53 : vector<8x32xf32>
      %c0_24 = arith.constant 0 : index
      %c0_25 = arith.constant 0 : index
      %55 = vector.load %arg15[%c0_24, %c0_25] : memref<8x1xf32, #tpu.memory_space<vmem>>, vector<8x1xf32>
      %56 = vector.broadcast %55 : vector<8x1xf32> to vector<8x32xf32>
      %57 = arith.addf %54, %56 : vector<8x32xf32>
      %cst_26 = arith.constant 0.000000e+00 : f32
      %58 = vector.broadcast %cst_26 : f32 to vector<8x32xf32>
      %59 = arith.maximumf %57, %58 : vector<8x32xf32>
      %cst_27 = arith.constant 0.000000e+00 : f32
      %60 = vector.broadcast %cst_27 : f32 to vector<8x2xf32>
      %61 = vector.extract_strided_slice %59 {offsets = [0, 0], sizes = [8, 30], strides = [1, 1]} : vector<8x32xf32> to vector<8x30xf32>
      %62 = tpu.concatenate %60, %61 in 1 : vector<8x2xf32>, vector<8x30xf32> -> vector<8x32xf32>
      %cst_28 = arith.constant 0.000000e+00 : f32
      %63 = vector.broadcast %cst_28 : f32 to vector<8x32xf32>
      %64 = arith.select %21, %62, %63 : vector<8x32xi1>, vector<8x32xf32>
      %cst_29 = arith.constant 0.000000e+00 : f32
      %65 = vector.broadcast %cst_29 : f32 to vector<8x1xf32>
      %66 = vector.extract_strided_slice %59 {offsets = [0, 0], sizes = [8, 31], strides = [1, 1]} : vector<8x32xf32> to vector<8x31xf32>
      %67 = tpu.concatenate %65, %66 in 1 : vector<8x1xf32>, vector<8x31xf32> -> vector<8x32xf32>
      %cst_30 = arith.constant 0.000000e+00 : f32
      %68 = vector.broadcast %cst_30 : f32 to vector<8x32xf32>
      %69 = arith.select %19, %67, %68 : vector<8x32xi1>, vector<8x32xf32>
      %70 = tpu.concatenate %64, %69, %59 in 0 : vector<8x32xf32>, vector<8x32xf32>, vector<8x32xf32> -> vector<24x32xf32>
      %c0_31 = arith.constant 0 : index
      %c0_32 = arith.constant 0 : index
      %71 = vector.load %arg9[%c0_31, %c0_32] : memref<8x24xf32, #tpu.memory_space<vmem>>, vector<8x24xf32>
      %cst_33 = arith.constant dense<0.000000e+00> : vector<8x32xf32>
      %72 = tpu.matmul %71, %70, %cst_33 {dimension_numbers = #tpu.dot_dimension_numbers<[1], [0], [0], [1], [0, 0, 1, 1], [], []>} : vector<8x24xf32>, vector<24x32xf32>, vector<8x32xf32> -> vector<8x32xf32>
      %c0_34 = arith.constant 0 : index
      %c0_35 = arith.constant 0 : index
      %73 = vector.load %arg10[%c0_34, %c0_35] : memref<8x1xf32, #tpu.memory_space<vmem>>, vector<8x1xf32>
      %74 = vector.broadcast %73 : vector<8x1xf32> to vector<8x32xf32>
      %75 = arith.addf %72, %74 : vector<8x32xf32>
      %76 = arith.addf %75, %0 : vector<8x32xf32>
      %c0_36 = arith.constant 0 : index
      %c0_37 = arith.constant 0 : index
      %77 = vector.load %arg11[%c0_36, %c0_37] : memref<8x32xf32, #tpu.memory_space<vmem>>, vector<8x32xf32>
      tpu.vector_store %arg11[%c0_36, %c0_37], %76 {strides = array<i32>} : memref<8x32xf32, #tpu.memory_space<vmem>>, vector<8x32xf32>,
    } else {
    }
    return
  }
  func.func @transform_0(%arg0: i32, %arg1: i32) -> (i32, i32) {
    %c0_i32 = arith.constant 0 : i32
    %c0_i32_0 = arith.constant 0 : i32
    return %c0_i32, %arg1 : i32, i32
  }
  func.func @transform_1(%arg0: i32, %arg1: i32) -> (i32, i32) {
    %c0_i32 = arith.constant 0 : i32
    %c0_i32_0 = arith.constant 0 : i32
    %c0_i32_1 = arith.constant 0 : i32
    return %c0_i32, %c0_i32_0 : i32, i32
  }
  func.func @transform_2(%arg0: i32, %arg1: i32) -> (i32, i32) {
    %c0_i32 = arith.constant 0 : i32
    %c0_i32_0 = arith.constant 0 : i32
    %c0_i32_1 = arith.constant 0 : i32
    return %c0_i32, %c0_i32_0 : i32, i32
  }
  func.func @transform_3(%arg0: i32, %arg1: i32) -> (i32, i32) {
    %c0_i32 = arith.constant 0 : i32
    %c0_i32_0 = arith.constant 0 : i32
    %c0_i32_1 = arith.constant 0 : i32
    return %c0_i32, %c0_i32_0 : i32, i32
  }
  func.func @transform_4(%arg0: i32, %arg1: i32) -> (i32, i32) {
    %c0_i32 = arith.constant 0 : i32
    %c0_i32_0 = arith.constant 0 : i32
    %c0_i32_1 = arith.constant 0 : i32
    return %c0_i32, %c0_i32_0 : i32, i32
  }
  func.func @transform_5(%arg0: i32, %arg1: i32) -> (i32, i32) {
    %c0_i32 = arith.constant 0 : i32
    %c0_i32_0 = arith.constant 0 : i32
    %c0_i32_1 = arith.constant 0 : i32
    return %c0_i32, %c0_i32_0 : i32, i32
  }
  func.func @transform_6(%arg0: i32, %arg1: i32) -> (i32, i32) {
    %c0_i32 = arith.constant 0 : i32
    %c0_i32_0 = arith.constant 0 : i32
    %c0_i32_1 = arith.constant 0 : i32
    return %c0_i32, %c0_i32_0 : i32, i32
  }
  func.func @transform_7(%arg0: i32, %arg1: i32) -> (i32, i32) {
    %c0_i32 = arith.constant 0 : i32
    %c0_i32_0 = arith.constant 0 : i32
    %c0_i32_1 = arith.constant 0 : i32
    return %c0_i32, %c0_i32_0 : i32, i32
  }
  func.func @transform_8(%arg0: i32, %arg1: i32) -> (i32, i32) {
    %c0_i32 = arith.constant 0 : i32
    %c0_i32_0 = arith.constant 0 : i32
    %c0_i32_1 = arith.constant 0 : i32
    return %c0_i32, %c0_i32_0 : i32, i32
  }
  func.func @transform_9(%arg0: i32, %arg1: i32) -> (i32, i32) {
    %0 = arith.muli %arg0, %arg1 : i32
    %c0_i32 = arith.constant 0 : i32
    %c0_i32_0 = arith.constant 0 : i32
    return %c0_i32, %0 : i32, i32
  }
}

</mosaic_0001>

<llo_original>
// kernel: tpu_custom_call.1
$region0: #{tpu_custom_call.1}
  #allocation0 [shape = 'u32[]', space=smem, size = 0x4, offset = 0x4, fixed_abs, tag = 'smem constant byte address 0x4 - core index']
  #allocation1 [shape = 'u32[144,128]{1,0:T(1,128)}', space=vmem, size = 0x12000, scoped, tag = 'internal scratch']
  #allocation2 [shape = 'f32[8,1]{1,0:T(8,128)}', space=vmem, size = 0x1000, scoped, tag = 'scratch operand']
  #allocation3 [shape = 'f32[8,1]{1,0:T(8,128)}', space=vmem, size = 0x1000, scoped, tag = 'scratch operand']
  #allocation4 [shape = 'f32[8,1]{1,0:T(8,128)}', space=vmem, size = 0x1000, scoped, tag = 'scratch operand']
  #allocation5 [shape = 'f32[8,1]{1,0:T(8,128)}', space=vmem, size = 0x1000, scoped, tag = 'scratch operand']
  %s0 = inlined_call_operand.vmem [shape: f32[8,32], index: 0, kind: input, shape index: {}]
  %s1 = inlined_call_operand.vmem [shape: f32[8,1], index: 1, kind: input, shape index: {}]
  %s2 = inlined_call_operand.vmem [shape: f32[8,1], index: 2, kind: input, shape index: {}]
  %s3 = inlined_call_operand.vmem [shape: f32[8,24], index: 3, kind: input, shape index: {}]
  %s4 = inlined_call_operand.vmem [shape: f32[8,1], index: 4, kind: input, shape index: {}]
  %s5 = inlined_call_operand.vmem [shape: f32[8,1], index: 5, kind: input, shape index: {}]
  %s6 = inlined_call_operand.vmem [shape: f32[8,1], index: 6, kind: input, shape index: {}]
  %s7 = inlined_call_operand.vmem [shape: f32[8,24], index: 7, kind: input, shape index: {}]
  %s8 = inlined_call_operand.vmem [shape: f32[8,1], index: 8, kind: input, shape index: {}]
  %s9 = inlined_call_operand.hbm [shape: f32[8,32], index: 9, kind: output, shape index: {}]
  %s10 = sld [smem:[#allocation0]]
  $region85: #{tpu_custom_call.1} parent=0
    _
  %s12 = ssub.s32 1, %s10
  %s13 = scalar_select 0, %s12, %s10
  $region1: #{tpu_custom_call.1} parent=0
    #allocation6 [shape = 'u8[8192]{0}', space=vmem, size = 0x2000, scoped, tag = 'output window, operand 0']
    #allocation7 [shape = 's32[2]{0}', space=sflag, size = 0x8, scoped, tag = 'scoped memory for tpu_custom_call.1']
    %14 = vsyncpa [#allocation7], 0
    %s15 = scalar_lea.sflag [#allocation7], 1
    %16 = vsyncpa %s15, 0
    loop: start=0, step=1, limit=4
    $region2: #{tpu_custom_call.1} parent=1 // loop_pre_header
      _
    $region3: #{tpu_custom_call.1} parent=1 // loop_header
      %s18 = sphi 0, %s22
      %p19 = scmp.ge.s32.totalorder %s18, 4
      %s25 = sphi 0, %s37
      %s26 = sphi 0, %s33
      %s27 = sphi 0, %s25
      %s28 = sphi 0, %s26
      %s29 = sphi 0, %s27
      %s30 = sphi 0, %s28
      %s40 = sphi 0, %s42
      %s43 = sphi 0, %s40
      %s44 = sphi 0, %s43
      %s60 = sphi 0, %s44
      %s64 = sphi 0, %s64
      %s66 = sphi 0, %s64
      %s67 = sphi 0, %s66
      %s81 = sphi 0, %s67
      %s85 = sphi 0, %s85
      %s87 = sphi 0, %s85
      %s88 = sphi 0, %s87
      %s102 = sphi 0, %s88
      %s106 = sphi 0, %s106
      %s108 = sphi 0, %s106
      %s109 = sphi 0, %s108
      %s123 = sphi 0, %s109
      %s127 = sphi 0, %s127
      %s129 = sphi 0, %s127
      %s130 = sphi 0, %s129
      %s144 = sphi 0, %s130
      %s148 = sphi 0, %s148
      %s150 = sphi 0, %s148
      %s151 = sphi 0, %s150
      %s165 = sphi 0, %s151
      %s169 = sphi 0, %s169
      %s171 = sphi 0, %s169
      %s172 = sphi 0, %s171
      %s186 = sphi 0, %s172
      %s190 = sphi 0, %s190
      %s192 = sphi 0, %s190
      %s193 = sphi 0, %s192
      %s207 = sphi 0, %s193
      %s211 = sphi 0, %s211
      %s213 = sphi 0, %s211
      %s214 = sphi 0, %s213
      %s228 = sphi 0, %s214
      %s236 = sphi 0, %s238
      %s239 = sphi 0, %s236
      %s240 = sphi 0, %s239
      %s256 = sphi 0, %s240
    $region4: #{tpu_custom_call.1} parent=1 // loop_header_branch
      %21 = sbr.rel (%p19) target = $region8
    $region5: #{tpu_custom_call.1} parent=1 // loop_body
      %s23 = ssub.s32 %s18, 1
      %s24 = ssub.s32 %s18, 2
      %s31 = sadd.s32 1, %s26
      %p32 = scmp.ge.s32.totalorder %s31, 1
      %s33 = scalar_select %p32, 0, %s31
      %s34 = sadd.s32 1, %s25
      %s35 = scalar_select %p32, %s34, %s25
      %p36 = scmp.ge.s32.totalorder %s35, 2
      %s37 = scalar_select %p36, 0, %s35
      %s38 = ssub.s32 %s26, %s33
      %p39 = scmp.eq.s32.totalorder %s38, 0
      %s41 = sadd.s32 %s40, 1
      %s42 = scalar_select %p39, %s40, %s41
      %p45 = pneg %p39
      %p46 = scmp.eq.s32.totalorder %s18, 1
      %p47 = por %p45, %p46
      %p48 = scmp.ne.s32.totalorder %s40, %s43
      %p49 = scmp.eq.s32.totalorder %s18, 0
      %p50 = por %p48, %p49
      %p51 = scmp.ne.s32.totalorder %s40, %s43
      %p52 = scmp.eq.s32.totalorder %s23, 1
      %p53 = por %p51, %p52
      %p54 = scmp.ne.s32.totalorder %s43, %s44
      %p55 = scmp.eq.s32.totalorder %s23, 0
      %p56 = por %p54, %p55
      %p57 = scmp.ne.s32.totalorder %s43, %s44
      %p58 = scmp.eq.s32.totalorder %s24, 1
      %p59 = por %p57, %p58
      %p61 = scmp.ne.s32.totalorder %s44, %s60
      %p62 = scmp.eq.s32.totalorder %s24, 0
      %p63 = por %p61, %p62
      %s65 = sadd.s32 %s64, 1
      %p68 = scmp.eq.s32.totalorder %s18, 1
      %p69 = scmp.ne.s32.totalorder %s64, %s66
      %p70 = scmp.eq.s32.totalorder %s18, 0
      %p71 = por %p69, %p70
      %p72 = scmp.ne.s32.totalorder %s64, %s66
      %p73 = scmp.eq.s32.totalorder %s23, 1
      %p74 = por %p72, %p73
      %p75 = scmp.ne.s32.totalorder %s66, %s67
      %p76 = scmp.eq.s32.totalorder %s23, 0
      %p77 = por %p75, %p76
      %p78 = scmp.ne.s32.totalorder %s66, %s67
      %p79 = scmp.eq.s32.totalorder %s24, 1
      %p80 = por %p78, %p79
      %p82 = scmp.ne.s32.totalorder %s67, %s81
      %p83 = scmp.eq.s32.totalorder %s24, 0
      %p84 = por %p82, %p83
      %s86 = sadd.s32 %s85, 1
      %p89 = scmp.eq.s32.totalorder %s18, 1
      %p90 = scmp.ne.s32.totalorder %s85, %s87
      %p91 = scmp.eq.s32.totalorder %s18, 0
      %p92 = por %p90, %p91
      %p93 = scmp.ne.s32.totalorder %s85, %s87
      %p94 = scmp.eq.s32.totalorder %s23, 1
      %p95 = por %p93, %p94
      %p96 = scmp.ne.s32.totalorder %s87, %s88
      %p97 = scmp.eq.s32.totalorder %s23, 0
      %p98 = por %p96, %p97
      %p99 = scmp.ne.s32.totalorder %s87, %s88
      %p100 = scmp.eq.s32.totalorder %s24, 1
      %p101 = por %p99, %p100
      %p103 = scmp.ne.s32.totalorder %s88, %s102
      %p104 = scmp.eq.s32.totalorder %s24, 0
      %p105 = por %p103, %p104
      %s107 = sadd.s32 %s106, 1
      %p110 = scmp.eq.s32.totalorder %s18, 1
      %p111 = scmp.ne.s32.totalorder %s106, %s108
      %p112 = scmp.eq.s32.totalorder %s18, 0
      %p113 = por %p111, %p112
      %p114 = scmp.ne.s32.totalorder %s106, %s108
      %p115 = scmp.eq.s32.totalorder %s23, 1
      %p116 = por %p114, %p115
      %p117 = scmp.ne.s32.totalorder %s108, %s109
      %p118 = scmp.eq.s32.totalorder %s23, 0
      %p119 = por %p117, %p118
      %p120 = scmp.ne.s32.totalorder %s108, %s109
      %p121 = scmp.eq.s32.totalorder %s24, 1
      %p122 = por %p120, %p121
      %p124 = scmp.ne.s32.totalorder %s109, %s123
      %p125 = scmp.eq.s32.totalorder %s24, 0
      %p126 = por %p124, %p125
      %s128 = sadd.s32 %s127, 1
      %p131 = scmp.eq.s32.totalorder %s18, 1
      %p132 = scmp.ne.s32.totalorder %s127, %s129
      %p133 = scmp.eq.s32.totalorder %s18, 0
      %p134 = por %p132, %p133
      %p135 = scmp.ne.s32.totalorder %s127, %s129
      %p136 = scmp.eq.s32.totalorder %s23, 1
      %p137 = por %p135, %p136
      %p138 = scmp.ne.s32.totalorder %s129, %s130
      %p139 = scmp.eq.s32.totalorder %s23, 0
      %p140 = por %p138, %p139
      %p141 = scmp.ne.s32.totalorder %s129, %s130
      %p142 = scmp.eq.s32.totalorder %s24, 1
      %p143 = por %p141, %p142
      %p145 = scmp.ne.s32.totalorder %s130, %s144
      %p146 = scmp.eq.s32.totalorder %s24, 0
      %p147 = por %p145, %p146
      %s149 = sadd.s32 %s148, 1
      %p152 = scmp.eq.s32.totalorder %s18, 1
      %p153 = scmp.ne.s32.totalorder %s148, %s150
      %p154 = scmp.eq.s32.totalorder %s18, 0
      %p155 = por %p153, %p154
      %p156 = scmp.ne.s32.totalorder %s148, %s150
      %p157 = scmp.eq.s32.totalorder %s23, 1
      %p158 = por %p156, %p157
      %p159 = scmp.ne.s32.totalorder %s150, %s151
      %p160 = scmp.eq.s32.totalorder %s23, 0
      %p161 = por %p159, %p160
      %p162 = scmp.ne.s32.totalorder %s150, %s151
      %p163 = scmp.eq.s32.totalorder %s24, 1
      %p164 = por %p162, %p163
      %p166 = scmp.ne.s32.totalorder %s151, %s165
      %p167 = scmp.eq.s32.totalorder %s24, 0
      %p168 = por %p166, %p167
      %s170 = sadd.s32 %s169, 1
      %p173 = scmp.eq.s32.totalorder %s18, 1
      %p174 = scmp.ne.s32.totalorder %s169, %s171
      %p175 = scmp.eq.s32.totalorder %s18, 0
      %p176 = por %p174, %p175
      %p177 = scmp.ne.s32.totalorder %s169, %s171
      %p178 = scmp.eq.s32.totalorder %s23, 1
      %p179 = por %p177, %p178
      %p180 = scmp.ne.s32.totalorder %s171, %s172
      %p181 = scmp.eq.s32.totalorder %s23, 0
      %p182 = por %p180, %p181
      %p183 = scmp.ne.s32.totalorder %s171, %s172
      %p184 = scmp.eq.s32.totalorder %s24, 1
      %p185 = por %p183, %p184
      %p187 = scmp.ne.s32.totalorder %s172, %s186
      %p188 = scmp.eq.s32.totalorder %s24, 0
      %p189 = por %p187, %p188
      %s191 = sadd.s32 %s190, 1
      %p194 = scmp.eq.s32.totalorder %s18, 1
      %p195 = scmp.ne.s32.totalorder %s190, %s192
      %p196 = scmp.eq.s32.totalorder %s18, 0
      %p197 = por %p195, %p196
      %p198 = scmp.ne.s32.totalorder %s190, %s192
      %p199 = scmp.eq.s32.totalorder %s23, 1
      %p200 = por %p198, %p199
      %p201 = scmp.ne.s32.totalorder %s192, %s193
      %p202 = scmp.eq.s32.totalorder %s23, 0
      %p203 = por %p201, %p202
      %p204 = scmp.ne.s32.totalorder %s192, %s193
      %p205 = scmp.eq.s32.totalorder %s24, 1
      %p206 = por %p204, %p205
      %p208 = scmp.ne.s32.totalorder %s193, %s207
      %p209 = scmp.eq.s32.totalorder %s24, 0
      %p210 = por %p208, %p209
      %s212 = sadd.s32 %s211, 1
      %p215 = scmp.eq.s32.totalorder %s18, 1
      %p216 = scmp.ne.s32.totalorder %s211, %s213
      %p217 = scmp.eq.s32.totalorder %s18, 0
      %p218 = por %p216, %p217
      %p219 = scmp.ne.s32.totalorder %s211, %s213
      %p220 = scmp.eq.s32.totalorder %s23, 1
      %p221 = por %p219, %p220
      %p222 = scmp.ne.s32.totalorder %s213, %s214
      %p223 = scmp.eq.s32.totalorder %s23, 0
      %p224 = por %p222, %p223
      %p225 = scmp.ne.s32.totalorder %s213, %s214
      %p226 = scmp.eq.s32.totalorder %s24, 1
      %p227 = por %p225, %p226
      %p229 = scmp.ne.s32.totalorder %s214, %s228
      %p230 = scmp.eq.s32.totalorder %s24, 0
      %p231 = por %p229, %p230
      %s232 = smul.u32 %s25, %s26
      %s233 = smul.u32 %s37, %s33
      %s234 = ssub.s32 %s232, %s233
      %p235 = scmp.eq.s32.totalorder %s234, 0
      %s237 = sadd.s32 %s236, 1
      %s238 = scalar_select %p235, %s236, %s237
      %p241 = pneg %p235
      %p242 = scmp.eq.s32.totalorder %s18, 1
      %p243 = por %p241, %p242
      %p244 = scmp.ne.s32.totalorder %s236, %s239
      %p245 = scmp.eq.s32.totalorder %s18, 0
      %p246 = por %p244, %p245
      %p247 = scmp.ne.s32.totalorder %s236, %s239
      %p248 = scmp.eq.s32.totalorder %s23, 1
      %p249 = por %p247, %p248
      %p250 = scmp.ne.s32.totalorder %s239, %s240
      %p251 = scmp.eq.s32.totalorder %s23, 0
      %p252 = por %p250, %p251
      %p253 = scmp.ne.s32.totalorder %s239, %s240
      %p254 = scmp.eq.s32.totalorder %s24, 1
      %p255 = por %p253, %p254
      %p257 = scmp.ne.s32.totalorder %s240, %s256
      %p258 = scmp.eq.s32.totalorder %s24, 0
      %p259 = por %p257, %p258
      %p260 = scmp.le.s32.totalorder 1, %s18
      %p261 = scmp.lt.s32.totalorder %s18, 3
      %p262 = pnand %p260, %p261
      %p263 = pneg %p262
      // Predicated region
      $region9: #{tpu_custom_call.1} parent=5 // pred_check
        _
      $region10: #{tpu_custom_call.1} parent=5 // pred_check_branch
        %265 = sbr.rel (%p262) target = $region12
      $region11: #{tpu_custom_call.1} parent=5 // pred_region
        %s266 = ssub.s32 %s18, 1
        // Predicated region
        $region13: #{tpu_custom_call.1} parent=11 // pred_check
          %p267 = pneg %p56
        $region14: #{tpu_custom_call.1} parent=11 // pred_check_branch
          %269 = sbr.rel (%p267) target = $region16
        $region15: #{tpu_custom_call.1} parent=11 // pred_region
          %p270 = scmp.lt.s32.totalorder %s28, 0
          %s271 = scalar_select %p270, %s28, 0
          %s272 = smul.addr %s271, 8
          %s273 = scalar_lea.vmem %s0, %s272
        $region16: #{tpu_custom_call.1} parent=11 // pred_fallthru
          _
        // Predicated region
        $region17: #{tpu_custom_call.1} parent=11 // pred_check
          %p274 = pneg %p77
        $region18: #{tpu_custom_call.1} parent=11 // pred_check_branch
          %276 = sbr.rel (%p274) target = $region20
        $region19: #{tpu_custom_call.1} parent=11 // pred_region
          _
        $region20: #{tpu_custom_call.1} parent=11 // pred_fallthru
          _
        // Predicated region
        $region21: #{tpu_custom_call.1} parent=11 // pred_check
          %p277 = pneg %p98
        $region22: #{tpu_custom_call.1} parent=11 // pred_check_branch
          %279 = sbr.rel (%p277) target = $region24
        $region23: #{tpu_custom_call.1} parent=11 // pred_region
          _
        $region24: #{tpu_custom_call.1} parent=11 // pred_fallthru
          _
        // Predicated region
        $region25: #{tpu_custom_call.1} parent=11 // pred_check
          %p280 = pneg %p119
        $region26: #{tpu_custom_call.1} parent=11 // pred_check_branch
          %282 = sbr.rel (%p280) target = $region28
        $region27: #{tpu_custom_call.1} parent=11 // pred_region
          _
        $region28: #{tpu_custom_call.1} parent=11 // pred_fallthru
          _
        // Predicated region
        $region29: #{tpu_custom_call.1} parent=11 // pred_check
          %p283 = pneg %p140
        $region30: #{tpu_custom_call.1} parent=11 // pred_check_branch
          %285 = sbr.rel (%p283) target = $region32
        $region31: #{tpu_custom_call.1} parent=11 // pred_region
          _
        $region32: #{tpu_custom_call.1} parent=11 // pred_fallthru
          _
        // Predicated region
        $region33: #{tpu_custom_call.1} parent=11 // pred_check
          %p286 = pneg %p161
        $region34: #{tpu_custom_call.1} parent=11 // pred_check_branch
          %288 = sbr.rel (%p286) target = $region36
        $region35: #{tpu_custom_call.1} parent=11 // pred_region
          _
        $region36: #{tpu_custom_call.1} parent=11 // pred_fallthru
          _
        // Predicated region
        $region37: #{tpu_custom_call.1} parent=11 // pred_check
          %p289 = pneg %p182
        $region38: #{tpu_custom_call.1} parent=11 // pred_check_branch
          %291 = sbr.rel (%p289) target = $region40
        $region39: #{tpu_custom_call.1} parent=11 // pred_region
          _
        $region40: #{tpu_custom_call.1} parent=11 // pred_fallthru
          _
        // Predicated region
        $region41: #{tpu_custom_call.1} parent=11 // pred_check
          %p292 = pneg %p203
        $region42: #{tpu_custom_call.1} parent=11 // pred_check_branch
          %294 = sbr.rel (%p292) target = $region44
        $region43: #{tpu_custom_call.1} parent=11 // pred_region
          _
        $region44: #{tpu_custom_call.1} parent=11 // pred_fallthru
          _
        // Predicated region
        $region45: #{tpu_custom_call.1} parent=11 // pred_check
          %p295 = pneg %p224
        $region46: #{tpu_custom_call.1} parent=11 // pred_check_branch
          %297 = sbr.rel (%p295) target = $region48
        $region47: #{tpu_custom_call.1} parent=11 // pred_region
          _
        $region48: #{tpu_custom_call.1} parent=11 // pred_fallthru
          _
      $region12: #{tpu_custom_call.1} parent=5 // pred_fallthru
        _
      %p298 = scmp.lt.s32.totalorder %s18, 2
      // Predicated region
      $region49: #{tpu_custom_call.1} parent=5 // pred_check
        %p299 = pneg %p298
      $region50: #{tpu_custom_call.1} parent=5 // pred_check_branch
        %301 = sbr.rel (%p299) target = $region52
      $region51: #{tpu_custom_call.1} parent=5 // pred_region
        _
      $region52: #{tpu_custom_call.1} parent=5 // pred_fallthru
        _
      %p302 = scmp.le.s32.totalorder 1, %s18
      %p303 = scmp.lt.s32.totalorder %s18, 3
      %p304 = pnand %p302, %p303
      %p305 = pneg %p304
      // Predicated region
      $region53: #{tpu_custom_call.1} parent=5 // pred_check
        _
      $region54: #{tpu_custom_call.1} parent=5 // pred_check_branch
        %307 = sbr.rel (%p304) target = $region56
      $region55: #{tpu_custom_call.1} parent=5 // pred_region
        %s308 = ssub.s32 %s18, 1
        %p309 = scmp.lt.s32.totalorder %s28, 0
        %s310 = scalar_select %p309, %s28, 0
        %s311 = smul.addr %s310, 8
        %s312 = scalar_lea.vmem %s0, %s311
        %p313 = pneg %p56
        %p314 = pneg %p53
        %p315 = pneg %p77
        %p316 = pneg %p74
        %p317 = pneg %p98
        %p318 = pneg %p95
        %p319 = pneg %p119
        %p320 = pneg %p116
        %p321 = pneg %p140
        %p322 = pneg %p137
        %p323 = pneg %p161
        %p324 = pneg %p158
        %p325 = pneg %p182
        %p326 = pneg %p179
        %p327 = pneg %p203
        %p328 = pneg %p200
        %p329 = pneg %p224
        %p330 = pneg %p221
        %p331 = pneg %p252
        %p332 = pneg %p249
        %s333 = sand.u32 %s239, 1
        %s334 = scalar_lea.sflag [#allocation7], %s333
        %s335 = sand.u32 %s239, 1
        %s336 = smul.addr %s335, 8
        %s337 = scalar_lea.vmem [#allocation6], %s336
        %p338 = scmp.lt.s32.totalorder %s28, 0
        %s339 = scalar_select %p338, %s28, 0
        %s340 = smul.addr %s339, 8
        %s341 = scalar_lea.vmem %s0, %s340
        %s342 = smul.u32 %s27, %s28
        %v343 = vld [vmem:[%s341] sm:$0xff]
        %v344 = vlaneseq
        %v345 = vand.u32 %v344, 127
        %vm346 = vcmp.lt.s32.totalorder %v345, 0
        %v347 = vsub.s32 0, %v345
        %v348 = vsel %vm346, %v347, %v345
        %v349 = vshrl.u32 %v348, 4
        %v350 = vand.u32 %v348, 15
        %v351 = vsub.s32 0, %v350
        %v352 = vsel %vm346, %v351, %v350
        %vm353 = vcmp.ne.s32.totalorder %v352, 0
        %vm354 = vcmp.lt.s32.totalorder %v352, 0
        %vm355 = vmand %vm354, %vm353
        %v356 = vadd.s32 %v352, 16
        %v357 = vsel %vm355, %v356, %v352
        %vm358 = vcmp.ge.s32.totalorder %v357, 1
        %vm359 = vcmp.ge.s32.totalorder %v357, 2
        %v360 = vld [vmem:[%s1] sm:$0xff]
        %362 = vset.pattern.permute.xlu0 0
        %363 = vperm.xlu0 %362, %v360
        %v364 = vpop.permute.xlu0 %363
        %v366 = vmul.f32 %v343, %v364
        %v367 = vld [vmem:[%s2] sm:$0xff]
        %369 = vset.pattern.permute.xlu0 0
        %370 = vperm.xlu0 %369, %v367
        %v371 = vpop.permute.xlu0 %370
        %v373 = vadd.f32 %v366, %v371
        %v374 = vmax.f32 %v373, 0.0
        %376 = vrot.lane.b32.xlu0 %v374, 2
        %v377 = vpop.permute.xlu0 %376
        %vm379 = vcmask 15360
        %v380 = vsel %vm379, 0.0, %v377
        %v381 = vsel %vm359, %v380, 0.0
        %382 = vrot.lane.b32.xlu0 %v374, 1
        %v383 = vpop.permute.xlu0 %382
        %vm385 = vcmask 7168
        %v386 = vsel %vm385, 0.0, %v383
        %v387 = vsel %vm358, %v386, 0.0
        %v388 = vld [vmem:[%s3] sm:$0xff]
        %v389 = vld [vmem:[%s4] sm:$0xff]
        %391 = vset.pattern.permute.xlu0 0
        %392 = vperm.xlu0 %391, %v389
        %v393 = vpop.permute.xlu0 %392
        %vm395 = vcmask 195584
        %v397 = vsel %vm395, %v388, 0
        %399 = vmatprep.subr.mxu0 0.0
        %400 = vmatpush1.msra.mxu0 %v381
        %401 = vmatprep.subr.mxu0 0.0
        %402 = vmatpush1.msra.mxu0 %v387
        %403 = vmatprep.subr.mxu0 0.0
        %404 = vmatpush1.msra.mxu0 %v374
        %405 = vmatprep.subr.mxu0 0.0
        %406 = vmatpush1.msra.mxu0 0.0
        %407 = vmatprep.subr.mxu0 0.0
        %408 = vmatpush1.msra.mxu0 0.0
        %409 = vmatprep.subr.mxu0 0.0
        %410 = vmatpush1.msra.mxu0 0.0
        %411 = vmatprep.subr.mxu0 0.0
        %412 = vmatpush1.msra.mxu0 0.0
        %413 = vmatprep.subr.mxu0 0.0
        %414 = vmatpush1.msra.mxu0 0.0
        %415 = vmatprep.subr.mxu0 0.0
        %416 = vmatpush1.msra.mxu0 0.0
        %417 = vmatprep.subr.mxu0 0.0
        %418 = vmatpush1.msra.mxu0 0.0
        %419 = vmatprep.subr.mxu0 0.0
        %420 = vmatpush1.msra.mxu0 0.0
        %421 = vmatprep.subr.mxu0 0.0
        %422 = vmatpush1.msra.mxu0 0.0
        %423 = vmatprep.subr.mxu0 0.0
        %424 = vmatpush1.msra.mxu0 0.0
        %425 = vmatprep.subr.mxu0 0.0
        %426 = vmatpush1.msra.mxu0 0.0
        %427 = vmatprep.subr.mxu0 0.0
        %428 = vmatpush1.msra.mxu0 0.0
        %429 = vmatprep.subr.mxu0 0.0
        %430 = vmatpush1.msra.mxu0 0.0
        %431 = vmatprep.subr.mxu0 0.0
        %432 = vmatpush1.msra.mxu0 0.0
        %433 = vmatprep.subr.mxu0 0.0
        %434 = vmatpush1.msra.mxu0 0.0
        %435 = vmatprep.subr.mxu0 0.0
        %436 = vmatpush1.msra.mxu0 0.0
        %437 = vmatprep.subr.mxu0 0.0
        %438 = vmatpush1.msra.mxu0 0.0
        %439 = vmatprep.subr.mxu0 0.0
        %440 = vmatpush1.msra.mxu0 0.0
        %441 = vmatprep.subr.mxu0 0.0
        %442 = vmatpush1.msra.mxu0 0.0
        %443 = vmatprep.subr.mxu0 0.0
        %444 = vmatpush1.msra.mxu0 0.0
        %445 = vmatprep.subr.mxu0 0.0
        %446 = vmatpush1.msra.mxu0 0.0
        %447 = vmatprep.subr.mxu0 0.0
        %448 = vmatpush1.msra.mxu0 0.0
        %449 = vmatprep.subr.mxu0 0.0
        %450 = vmatpush1.msra.mxu0 0.0
        %451 = vmatprep.subr.mxu0 0.0
        %452 = vmatpush1.msra.mxu0 0.0
        %453 = vmatprep.subr.mxu0 0.0
        %454 = vmatpush1.msra.mxu0 0.0
        %455 = vmatprep.subr.mxu0 0.0
        %456 = vmatpush1.msra.mxu0 0.0
        %457 = vmatprep.subr.mxu0 0.0
        %458 = vmatpush1.msra.mxu0 0.0
        %459 = vmatprep.subr.mxu0 0.0
        %460 = vmatpush1.msra.mxu0 0.0
        %461 = vmatprep.subr.mxu0 0.0
        %462 = vmatpush1.msra.mxu0 0.0
        %463 = vmatprep.mubr.f32.mxu0 0.0
        %464 = vmatmul.mubr.f32.gmra.mrb[0].mxu0 %v397
        %v465 = vpop.f32.mrb[0].mxu0
        %v466 = vadd.f32 %v393, %v465
        %v467 = vpop.f32.mrb[0].mxu0
        %468 = vdwg.mxu0
        %p469 = scmp.eq.s32.totalorder %s27, 0
        // Predicated region
        $region57: #{tpu_custom_call.1} parent=55 // pred_check
          %p470 = pneg %p469
        $region58: #{tpu_custom_call.1} parent=55 // pred_check_branch
          %472 = sbr.rel (%p470) target = $region60
        $region59: #{tpu_custom_call.1} parent=55 // pred_region
          %p473 = scmp.eq.s32.totalorder %s28, 0
          // Predicated region
          $region61: #{tpu_custom_call.1} parent=59 // pred_check
            %p474 = pneg %p473
          $region62: #{tpu_custom_call.1} parent=59 // pred_check_branch
            %476 = sbr.rel (%p474) target = $region64
          $region63: #{tpu_custom_call.1} parent=59 // pred_region
            %477 = vst.msk [vmem:[#allocation2] sm:$0xff] %vm385, 0.0
            %478 = vst.msk [vmem:[#allocation3] sm:$0xff] %vm385, 0.0
          $region64: #{tpu_custom_call.1} parent=59 // pred_fallthru
            _
          %v479 = vld [vmem:[#allocation2] sm:$0xff]
          %vm480 = vcmask 261120
          %v481 = vsel %vm480, %v466, 0.0
          %482 = vadd.xlane.f32.xlu0 %v481
          %v483 = vpop.xlane.xlu0 %482
          %v484 = vadd.f32 %v479, %v483
          %485 = vst.msk [vmem:[#allocation2] sm:$0xff] %vm385, %v484
          %v486 = vld [vmem:[#allocation3] sm:$0xff]
          %v487 = vmul.f32 %v466, %v466
          %v488 = vsel %vm480, %v487, 0.0
          %489 = vadd.xlane.f32.xlu0 %v488
          %v490 = vpop.xlane.xlu0 %489
          %v491 = vadd.f32 %v486, %v490
          %492 = vst.msk [vmem:[#allocation3] sm:$0xff] %vm385, %v491
          // Predicated region
          $region65: #{tpu_custom_call.1} parent=59 // pred_check
            %p493 = pneg %p473
          $region66: #{tpu_custom_call.1} parent=59 // pred_check_branch
            %495 = sbr.rel (%p493) target = $region68
          $region67: #{tpu_custom_call.1} parent=59 // pred_region
            %v496 = vld [vmem:[#allocation2] sm:$0xff]
            %v497 = vmul.f32 %v496, 0.03125
            %v498 = vld [vmem:[#allocation3] sm:$0xff]
            %v499 = vmul.f32 %v498, 0.03125
            %v500 = vmul.f32 %v497, %v497
            %v501 = vsub.f32 %v499, %v500
            %v502 = vmax.f32 %v501, 0.0
            %v503 = vadd.f32 %v502, 1e-05
            %v504 = vrsqrt.pop %v503
            %v505 = vld [vmem:[%s5] sm:$0xff]
            %v506 = vmul.f32 %v505, %v504
            %507 = vst.msk [vmem:[#allocation4] sm:$0xff] %vm385, %v506
            %v508 = vld [vmem:[%s6] sm:$0xff]
            %v509 = vld [vmem:[%s5] sm:$0xff]
            %v510 = vmul.f32 %v497, %v509
            %v511 = vmul.f32 %v510, %v504
            %v512 = vsub.f32 %v508, %v511
            %513 = vst.msk [vmem:[#allocation5] sm:$0xff] %vm385, %v512
          $region68: #{tpu_custom_call.1} parent=59 // pred_fallthru
            _
        $region60: #{tpu_custom_call.1} parent=55 // pred_fallthru
          _
        %p514 = scmp.eq.s32.totalorder %s27, 1
        // Predicated region
        $region69: #{tpu_custom_call.1} parent=55 // pred_check
          %p515 = pneg %p514
        $region70: #{tpu_custom_call.1} parent=55 // pred_check_branch
          %517 = sbr.rel (%p515) target = $region72
        $region71: #{tpu_custom_call.1} parent=55 // pred_region
          %v518 = vld [vmem:[#allocation4] sm:$0xff]
          %520 = vset.pattern.permute.xlu0 0
          %521 = vperm.xlu0 %520, %v518
          %v522 = vpop.permute.xlu0 %521
          %v524 = vmul.f32 %v466, %v522
          %v525 = vld [vmem:[#allocation5] sm:$0xff]
          %527 = vset.pattern.permute.xlu0 0
          %528 = vperm.xlu0 %527, %v525
          %v529 = vpop.permute.xlu0 %528
          %v531 = vadd.f32 %v524, %v529
          %v532 = vmax.f32 %v531, 0.0
          %534 = vrot.lane.b32.xlu0 %v532, 2
          %v535 = vpop.permute.xlu0 %534
          %v537 = vsel %vm379, 0.0, %v535
          %v538 = vsel %vm359, %v537, 0.0
          %539 = vrot.lane.b32.xlu0 %v532, 1
          %v540 = vpop.permute.xlu0 %539
          %v542 = vsel %vm385, 0.0, %v540
          %v543 = vsel %vm358, %v542, 0.0
          %v544 = vld [vmem:[%s7] sm:$0xff]
          %v545 = vld [vmem:[%s8] sm:$0xff]
          %547 = vset.pattern.permute.xlu0 0
          %548 = vperm.xlu0 %547, %v545
          %v549 = vpop.permute.xlu0 %548
          %v552 = vsel %vm395, %v544, 0
          %554 = vmatprep.subr.mxu0 0.0
          %555 = vmatpush1.msra.mxu0 %v538
          %556 = vmatprep.subr.mxu0 0.0
          %557 = vmatpush1.msra.mxu0 %v543
          %558 = vmatprep.subr.mxu0 0.0
          %559 = vmatpush1.msra.mxu0 %v532
          %560 = vmatprep.subr.mxu0 0.0
          %561 = vmatpush1.msra.mxu0 0.0
          %562 = vmatprep.subr.mxu0 0.0
          %563 = vmatpush1.msra.mxu0 0.0
          %564 = vmatprep.subr.mxu0 0.0
          %565 = vmatpush1.msra.mxu0 0.0
          %566 = vmatprep.subr.mxu0 0.0
          %567 = vmatpush1.msra.mxu0 0.0
          %568 = vmatprep.subr.mxu0 0.0
          %569 = vmatpush1.msra.mxu0 0.0
          %570 = vmatprep.subr.mxu0 0.0
          %571 = vmatpush1.msra.mxu0 0.0
          %572 = vmatprep.subr.mxu0 0.0
          %573 = vmatpush1.msra.mxu0 0.0
          %574 = vmatprep.subr.mxu0 0.0
          %575 = vmatpush1.msra.mxu0 0.0
          %576 = vmatprep.subr.mxu0 0.0
          %577 = vmatpush1.msra.mxu0 0.0
          %578 = vmatprep.subr.mxu0 0.0
          %579 = vmatpush1.msra.mxu0 0.0
          %580 = vmatprep.subr.mxu0 0.0
          %581 = vmatpush1.msra.mxu0 0.0
          %582 = vmatprep.subr.mxu0 0.0
          %583 = vmatpush1.msra.mxu0 0.0
          %584 = vmatprep.subr.mxu0 0.0
          %585 = vmatpush1.msra.mxu0 0.0
          %586 = vmatprep.subr.mxu0 0.0
          %587 = vmatpush1.msra.mxu0 0.0
          %588 = vmatprep.subr.mxu0 0.0
          %589 = vmatpush1.msra.mxu0 0.0
          %590 = vmatprep.subr.mxu0 0.0
          %591 = vmatpush1.msra.mxu0 0.0
          %592 = vmatprep.subr.mxu0 0.0
          %593 = vmatpush1.msra.mxu0 0.0
          %594 = vmatprep.subr.mxu0 0.0
          %595 = vmatpush1.msra.mxu0 0.0
          %596 = vmatprep.subr.mxu0 0.0
          %597 = vmatpush1.msra.mxu0 0.0
          %598 = vmatprep.subr.mxu0 0.0
          %599 = vmatpush1.msra.mxu0 0.0
          %600 = vmatprep.subr.mxu0 0.0
          %601 = vmatpush1.msra.mxu0 0.0
          %602 = vmatprep.subr.mxu0 0.0
          %603 = vmatpush1.msra.mxu0 0.0
          %604 = vmatprep.subr.mxu0 0.0
          %605 = vmatpush1.msra.mxu0 0.0
          %606 = vmatprep.subr.mxu0 0.0
          %607 = vmatpush1.msra.mxu0 0.0
          %608 = vmatprep.subr.mxu0 0.0
          %609 = vmatpush1.msra.mxu0 0.0
          %610 = vmatprep.subr.mxu0 0.0
          %611 = vmatpush1.msra.mxu0 0.0
          %612 = vmatprep.subr.mxu0 0.0
          %613 = vmatpush1.msra.mxu0 0.0
          %614 = vmatprep.subr.mxu0 0.0
          %615 = vmatpush1.msra.mxu0 0.0
          %616 = vmatprep.subr.mxu0 0.0
          %617 = vmatpush1.msra.mxu0 0.0
          %618 = vmatprep.mubr.f32.mxu0 0.0
          %619 = vmatmul.mubr.f32.gmra.mrb[0].mxu0 %v552
          %v620 = vpop.f32.mrb[0].mxu0
          %v621 = vadd.f32 %v549, %v620
          %v622 = vpop.f32.mrb[0].mxu0
          %623 = vdwg.mxu0
          %v624 = vadd.f32 %v621, %v343
          %vm625 = vcmask 261120
          %626 = vst.msk [vmem:[%s337] sm:$0xff] %vm625, %v624
        $region72: #{tpu_custom_call.1} parent=55 // pred_fallthru
          _
        %s627 = sand.u32 %s239, 1
        %s628 = scalar_lea.sflag [#allocation7], %s627
        %s629 = sand.u32 %s239, 1
        %s630 = smul.addr %s629, 8
        %s631 = scalar_lea.vmem [#allocation6], %s630
        // Predicated region
        $region73: #{tpu_custom_call.1} parent=55 // pred_check
          %p632 = pneg %p249
        $region74: #{tpu_custom_call.1} parent=55 // pred_check_branch
          %634 = sbr.rel (%p632) target = $region76
        $region75: #{tpu_custom_call.1} parent=55 // pred_region
          %s635 = smul.u32 %s27, %s28
          %s637 = ssub.s32 128, 128
          %638 = vsyncadd %s628, %s637
          %s639 = smul.addr %s635, 128
          %s640 = scalar_lea.hbm %s9, %s639
          %s642 = sshll.u32 %s631, 4
          %s643 = int_to_ptr.vmem [resolvable:$true] %s642
          %645 = dma.vmem_to_hbm [thread:$0]  %s643, 128, %s640, %s628
        $region76: #{tpu_custom_call.1} parent=55 // pred_fallthru
          _
      $region56: #{tpu_custom_call.1} parent=5 // pred_fallthru
        _
      %p646 = scmp.le.s32.totalorder 2, %s18
      // Predicated region
      $region77: #{tpu_custom_call.1} parent=5 // pred_check
        %p647 = pneg %p646
      $region78: #{tpu_custom_call.1} parent=5 // pred_check_branch
        %649 = sbr.rel (%p647) target = $region80
      $region79: #{tpu_custom_call.1} parent=5 // pred_region
        %s650 = ssub.s32 %s18, 2
        // Predicated region
        $region81: #{tpu_custom_call.1} parent=79 // pred_check
          %p651 = pneg %p255
        $region82: #{tpu_custom_call.1} parent=79 // pred_check_branch
          %653 = sbr.rel (%p651) target = $region84
        $region83: #{tpu_custom_call.1} parent=79 // pred_region
          %s654 = sand.u32 %s240, 1
          %s655 = scalar_lea.sflag [#allocation7], %s654
          %s656 = sand.u32 %s240, 1
          %s657 = smul.addr %s656, 8
          %s658 = scalar_lea.vmem [#allocation6], %s657
          %659 = dma.done %s655, 128
        $region84: #{tpu_custom_call.1} parent=79 // pred_fallthru
          _
      $region80: #{tpu_custom_call.1} parent=5 // pred_fallthru
        _
    $region6: #{tpu_custom_call.1} parent=1 // loop_footer
      %s22 = sadd.s32 1, %s18
    $region7: #{tpu_custom_call.1} parent=1 // loop_footer_branch
      %17 = sbr.rel target = $region3
    $region8: #{tpu_custom_call.1} parent=1 // loop_exit
      _
    %660 = vsyncpa [#allocation7], 1
    %s661 = scalar_lea.sflag [#allocation7], 1
    %662 = vsyncpa %s661, 1

</llo_original>
